<compile_context>
chip_gen: v7x
topology: tpu7x:2x2x1
jax: 0.10.0
libtpu: 0.0.40
codegen_flags: <defaults>
</compile_context>

<pallas_src>
import functools

import jax
import jax.numpy as jnp
from jax.experimental import pallas as pl
from jax.experimental.pallas import tpu as pltpu


def _round_up(x, m):
    return ((x + m - 1) // m) * m


@functools.lru_cache(maxsize=1)
def _num_tensorcores():
    """Best-effort TensorCores per chip: 2 on v4/v5p/v7x, 1 on v5e/v6e."""
    try:
        kind = jax.devices()[0].device_kind.lower()
    except Exception:
        return 1
    if "lite" in kind or "v5e" in kind or "v6" in kind:
        return 1
    if "v4" in kind or "v5p" in kind or "v7" in kind or "7x" in kind:
        return 2
    return 1


def _pick_block_b(B, num_tc, *, min_grid_b=512, max_tile=4096):
    """Batch tile size. None => grid-less single invocation.

    Single-TC: grid-less up to max_tile rows, then fewest max_tile tiles.
    Dual-TC:   exactly num_tc parallel tiles for B >= min_grid_b, capped at
               max_tile rows per tile for VMEM headroom.
    """
    if B < min_grid_b:
        return None
    n_steps = max(num_tc, -(-B // max_tile))   # ceil division
    if n_steps <= 1:
        return None
    block_b = _round_up(-(-B // n_steps), 8)
    if block_b >= B:
        return None
    return block_b


def _fused_mlp_kernel(state_ref, w_ref, b_ref, q1_ref, q2_ref, *,
                      row_starts, in_sizes, out_sizes, nA):
    """Fused twin-Q MLP: 4 linear layers (relu on all but the last), weights
    read from one packed slab via static (free) ref slices.  The two Q heads
    are the lane-halves of the last fused layer and are stored to two
    separate outputs (no post-kernel slice/copy in XLA)."""
    h = state_ref[...]
    n_layers = len(row_starts)
    for i in range(n_layers):
        r, k, n = row_starts[i], in_sizes[i], out_sizes[i]
        z = (jnp.dot(h, w_ref[r:r + k, :n],
                     preferred_element_type=jnp.float32)
             + b_ref[i:i + 1, :n])
        # Keep dot -> add -> max chained on the dot result so the scheduler
        # overlaps MXU result pop of layer i with the push of layer i+1.
        h = jnp.maximum(z, 0.0) if i < n_layers - 1 else z
    # TODO(synk): TD3 target-net callers that immediately take min(q1, q2)
    # should use a variant storing jnp.minimum(h[:, :nA], h[:, nA:]) instead
    # (halves output bytes and removes the downstream min op).
    q1_ref[...] = h[:, :nA].astype(q1_ref.dtype)
    q2_ref[...] = h[:, nA:2 * nA].astype(q2_ref.dtype)


@functools.partial(jax.jit, static_argnums=(3, 4, 5, 6))
def _forward_impl(state, w_slab, b_slab, row_starts, in_sizes, out_sizes,
                  block_b):
    B, dimS = state.shape
    nA = out_sizes[-1] // 2          # fused last layer is lane-merged [*, 2*nA]

    kernel = functools.partial(_fused_mlp_kernel, row_starts=row_starts,
                               in_sizes=in_sizes, out_sizes=out_sizes, nA=nA)

    out_shape = (jax.ShapeDtypeStruct((B, nA), jnp.float32),
                 jax.ShapeDtypeStruct((B, nA), jnp.float32))

    # Advisory cost so XLA can overlap this tiny custom call with neighbouring
    # ops in the RL training step instead of treating it as an opaque barrier.
    flops = 2 * B * sum(k * n for k, n in zip(in_sizes, out_sizes))
    bytes_accessed = (B * dimS * 4 + w_slab.size * 4 + b_slab.size * 4
                      + 2 * B * nA * 4)
    cost = pl.CostEstimate(flops=int(flops), transcendentals=0,
                           bytes_accessed=int(bytes_accessed))

    use_grid = (block_b is not None) and (0 < block_b < B)
    if use_grid:
        # Batch-tiled path: weights stay VMEM resident (same block every step,
        # single-buffered), state/output DMAs are pipelined, and the parallel
        # axis lets the second TensorCore (v7x / megacore) take half the rows.
        # A non-divisible B just gets a Pallas-masked boundary block.
        grid = (pl.cdiv(B, block_b),)
        q1, q2 = pl.pallas_call(
            kernel,
            out_shape=out_shape,
            grid=grid,
            in_specs=[
                pl.BlockSpec((block_b, dimS), lambda i: (i, 0)),
                pl.BlockSpec(w_slab.shape, lambda i: (0, 0),
                             pipeline_mode=pl.Buffered(1)),
                pl.BlockSpec(b_slab.shape, lambda i: (0, 0),
                             pipeline_mode=pl.Buffered(1)),
            ],
            out_specs=(pl.BlockSpec((block_b, nA), lambda i: (i, 0)),
                       pl.BlockSpec((block_b, nA), lambda i: (i, 0))),
            compiler_params=pltpu.CompilerParams(
                dimension_semantics=("parallel",),
                vmem_limit_bytes=48 * 1024 * 1024),
            cost_estimate=cost,
        )(state, w_slab, b_slab)
    else:
        # Small / single-TC batch: one grid-less invocation, full-array blocks.
        q1, q2 = pl.pallas_call(
            kernel,
            out_shape=out_shape,
            in_specs=[
                pl.BlockSpec(state.shape, lambda: (0, 0)),
                pl.BlockSpec(w_slab.shape, lambda: (0, 0)),
                pl.BlockSpec(b_slab.shape, lambda: (0, 0)),
            ],
            out_specs=(pl.BlockSpec((B, nA), lambda: (0, 0)),
                       pl.BlockSpec((B, nA), lambda: (0, 0))),
            compiler_params=pltpu.CompilerParams(
                vmem_limit_bytes=48 * 1024 * 1024),
            cost_estimate=cost,
        )(state, w_slab, b_slab)
    return q1, q2


def double_critic_forward(state, fused_params, *, block_b="auto"):
    """state: [B, dimS] f32 -> (q1, q2), each [B, nA].

    block_b: "auto" (chip-aware tile pick), None (force grid-less), or an int
    (forced tile, rounded up to a multiple of 8; batch tails are handled by a
    masked boundary block)."""
    B = state.shape[0]
    if isinstance(block_b, str) and block_b == "auto":
        block_b = _pick_block_b(B, _num_tensorcores())
    elif block_b is not None:
        block_b = _round_up(int(block_b), 8)
    return _forward_impl(state, fused_params["w_slab"], fused_params["b_slab"],
                         fused_params["row_starts"], fused_params["in_sizes"],
                         fused_params["out_sizes"], block_b)


def fuse_params(params, dimS, nA, hidden1, hidden2, hidden3):
    """One-time packing (outside the hot path):
       - fuse the two Q heads: [w1||w5], block-diag(w2,w6), block-diag(w3,w7),
         block-diag(w4,w8); biases concatenated along lanes.
       - pack all fused weights into a single row-aligned slab and all biases
         into a single slab.
    NOTE: on v6e/v7x a bf16 weight slab (keeping f32 accumulation) would halve
    slab DMA bytes; kept f32 here for v5e compatibility and exactness."""
    def bdiag(a, b):
        z_tr = jnp.zeros((a.shape[0], b.shape[1]), jnp.float32)
        z_bl = jnp.zeros((b.shape[0], a.shape[1]), jnp.float32)
        return jnp.concatenate(
            [jnp.concatenate([a, z_tr], axis=1),
             jnp.concatenate([z_bl, b], axis=1)], axis=0)

    Ws = [
        jnp.concatenate([params["w1"], params["w5"]], axis=1),  # [dimS, 2*h1]
        bdiag(params["w2"], params["w6"]),                      # [2*h1, 2*h2]
        bdiag(params["w3"], params["w7"]),                      # [2*h2, 2*h3]
        bdiag(params["w4"], params["w8"]),                      # [2*h3, 2*nA]
    ]
    Bs = [
        jnp.concatenate([params["b1"], params["b5"]], axis=1),
        jnp.concatenate([params["b2"], params["b6"]], axis=1),
        jnp.concatenate([params["b3"], params["b7"]], axis=1),
        jnp.concatenate([params["b4"], params["b8"]], axis=1),
    ]

    in_sizes = tuple(int(w.shape[0]) for w in Ws)
    out_sizes = tuple(int(w.shape[1]) for w in Ws)
    wmax = max(out_sizes)

    row_starts, r = [], 0
    for k in in_sizes:
        row_starts.append(r)
        r += _round_up(k, 8)          # every layer starts on a multiple-of-8 row
    total_rows = _round_up(r, 8)

    w_slab = jnp.zeros((total_rows, wmax), jnp.float32)
    for w, r0, k, n in zip(Ws, row_starts, in_sizes, out_sizes):
        w_slab = w_slab.at[r0:r0 + k, :n].set(w.astype(jnp.float32))

    b_slab = jnp.zeros((_round_up(len(Bs), 8), wmax), jnp.float32)
    for i, (b, n) in enumerate(zip(Bs, out_sizes)):
        b_slab = b_slab.at[i:i + 1, :n].set(b.astype(jnp.float32))

    return {
        "w_slab": w_slab,
        "b_slab": b_slab,
        "row_starts": tuple(row_starts),
        "in_sizes": in_sizes,
        "out_sizes": out_sizes,
    }


def init_params(key, dimS, nA, hidden1, hidden2, hidden3):
    """PyTorch nn.Linear-style init: U(-1/sqrt(fan_in), 1/sqrt(fan_in)).
    Weights stored [in, out] (transposed from PyTorch), biases [1, out]."""
    dims = {
        "1": (dimS, hidden1), "2": (hidden1, hidden2),
        "3": (hidden2, hidden3), "4": (hidden3, nA),
        "5": (dimS, hidden1), "6": (hidden1, hidden2),
        "7": (hidden2, hidden3), "8": (hidden3, nA),
    }
    params = {}
    for name, (fan_in, fan_out) in dims.items():
        key, kw, kb = jax.random.split(key, 3)
        bound = 1.0 / jnp.sqrt(jnp.asarray(fan_in, jnp.float32))
        params[f"w{name}"] = jax.random.uniform(
            kw, (fan_in, fan_out), jnp.float32, -bound, bound)
        params[f"b{name}"] = jax.random.uniform(
            kb, (1, fan_out), jnp.float32, -bound, bound)
    return params


def reference_forward(state, params):
    """Pure-JAX reference of DoubleCritic.forward (num_layer != 2 path),
    using the ORIGINAL unfused parameters."""
    def lin(h, w, b):
        return h @ w + b
    x1 = jax.nn.relu(lin(state, params["w1"], params["b1"]))
    x1 = jax.nn.relu(lin(x1, params["w2"], params["b2"]))
    x1 = jax.nn.relu(lin(x1, params["w3"], params["b3"]))
    x1 = lin(x1, params["w4"], params["b4"])
    x2 = jax.nn.relu(lin(state, params["w5"], params["b5"]))
    x2 = jax.nn.relu(lin(x2, params["w6"], params["b6"]))
    x2 = jax.nn.relu(lin(x2, params["w7"], params["b7"]))
    x2 = lin(x2, params["w8"], params["b8"])
    return x1, x2


if __name__ == "__main__":
    # Shapes consistent with the module (num_layer=3 branch):
    # dimS=16, nA=4, hidden1=hidden2=hidden3=32.
    dimS, nA = 16, 4
    hidden1 = hidden2 = hidden3 = 32

    key = jax.random.PRNGKey(0)
    key, k_small, k_tail, k_big = jax.random.split(key, 4)
    params = init_params(key, dimS, nA, hidden1, hidden2, hidden3)
    fused = fuse_params(params, dimS, nA, hidden1, hidden2, hidden3)

    def check(state, q1, q2, tag):
        r1, r2 = reference_forward(state, params)
        assert jnp.allclose(q1, r1, atol=1e-4, rtol=1e-4), f"Q1 mismatch ({tag})"
        assert jnp.allclose(q2, r2, atol=1e-4, rtol=1e-4), f"Q2 mismatch ({tag})"

    # --- small batch: grid-less single invocation (auto policy) ---
    state_small = jax.random.normal(k_small, (8, dimS), jnp.float32)
    q1, q2 = double_critic_forward(state_small, fused)
    q1 = jax.block_until_ready(q1)
    q2 = jax.block_until_ready(q2)
    check(state_small, q1, q2, "B=8 auto")

    # --- forced gridded path with a non-divisible batch (masked tail block) ---
    state_tail = jax.random.normal(k_tail, (520, dimS), jnp.float32)
    q1t, q2t = double_critic_forward(state_tail, fused, block_b=256)
    q1t = jax.block_until_ready(q1t)
    q2t = jax.block_until_ready(q2t)
    check(state_tail, q1t, q2t, "B=520 block_b=256")

    # --- replay-sized batch with the chip-aware auto policy ---
    state_big = jax.random.normal(k_big, (4096, dimS), jnp.float32)
    q1b, q2b = double_critic_forward(state_big, fused)
    q1b = jax.block_until_ready(q1b)
    q2b = jax.block_until_ready(q2b)
    check(state_big, q1b, q2b, "B=4096 auto")

    print("KERNEL_OK")
</pallas_src>

<mosaic_0001>
module attributes {stable_mosaic.version = 11 : i64} {
  func.func @_fused_mlp_kernel(%arg0: memref<8x16xf32, #tpu.memory_space<vmem>>, %arg1: memref<208x64xf32, #tpu.memory_space<vmem>>, %arg2: memref<8x64xf32, #tpu.memory_space<vmem>>, %arg3: memref<8x4xf32, #tpu.memory_space<vmem>>, %arg4: memref<8x4xf32, #tpu.memory_space<vmem>>) attributes {dimension_semantics = [], scalar_prefetch = 0 : i64, scratch_operands = 0 : i64, tpu.core_type = #tpu.core_type<tc>} {
    %c0 = arith.constant 0 : index
    %c0_0 = arith.constant 0 : index
    %0 = vector.load %arg0[%c0, %c0_0] : memref<8x16xf32, #tpu.memory_space<vmem>>, vector<8x16xf32>
    %c0_1 = arith.constant 0 : index
    %c0_2 = arith.constant 0 : index
    %1 = vector.load %arg1[%c0_1, %c0_2] : memref<208x64xf32, #tpu.memory_space<vmem>>, vector<16x64xf32>
    %cst = arith.constant dense<0.000000e+00> : vector<8x64xf32>
    %2 = tpu.matmul %0, %1, %cst {dimension_numbers = #tpu.dot_dimension_numbers<[1], [0], [0], [1], [0, 0, 1, 1], [], []>} : vector<8x16xf32>, vector<16x64xf32>, vector<8x64xf32> -> vector<8x64xf32>
    %c0_3 = arith.constant 0 : index
    %c0_4 = arith.constant 0 : index
    %3 = vector.load %arg2[%c0_3, %c0_4] : memref<8x64xf32, #tpu.memory_space<vmem>>, vector<1x64xf32>
    %4 = vector.broadcast %3 : vector<1x64xf32> to vector<8x64xf32>
    %5 = arith.addf %2, %4 : vector<8x64xf32>
    %cst_5 = arith.constant 0.000000e+00 : f32
    %6 = vector.broadcast %cst_5 : f32 to vector<8x64xf32>
    %7 = arith.maximumf %5, %6 : vector<8x64xf32>
    %c16 = arith.constant 16 : index
    %c0_6 = arith.constant 0 : index
    %8 = vector.load %arg1[%c16, %c0_6] : memref<208x64xf32, #tpu.memory_space<vmem>>, vector<64x64xf32>
    %cst_7 = arith.constant dense<0.000000e+00> : vector<8x64xf32>
    %9 = tpu.matmul %7, %8, %cst_7 {dimension_numbers = #tpu.dot_dimension_numbers<[1], [0], [0], [1], [0, 0, 1, 1], [], []>} : vector<8x64xf32>, vector<64x64xf32>, vector<8x64xf32> -> vector<8x64xf32>
    %c1 = arith.constant 1 : index
    %c0_8 = arith.constant 0 : index
    %10 = vector.load %arg2[%c1, %c0_8] : memref<8x64xf32, #tpu.memory_space<vmem>>, vector<1x64xf32>
    %11 = vector.broadcast %10 : vector<1x64xf32> to vector<8x64xf32>
    %12 = arith.addf %9, %11 : vector<8x64xf32>
    %cst_9 = arith.constant 0.000000e+00 : f32
    %13 = vector.broadcast %cst_9 : f32 to vector<8x64xf32>
    %14 = arith.maximumf %12, %13 : vector<8x64xf32>
    %c80 = arith.constant 80 : index
    %c0_10 = arith.constant 0 : index
    %15 = vector.load %arg1[%c80, %c0_10] : memref<208x64xf32, #tpu.memory_space<vmem>>, vector<64x64xf32>
    %cst_11 = arith.constant dense<0.000000e+00> : vector<8x64xf32>
    %16 = tpu.matmul %14, %15, %cst_11 {dimension_numbers = #tpu.dot_dimension_numbers<[1], [0], [0], [1], [0, 0, 1, 1], [], []>} : vector<8x64xf32>, vector<64x64xf32>, vector<8x64xf32> -> vector<8x64xf32>
    %c2 = arith.constant 2 : index
    %c0_12 = arith.constant 0 : index
    %17 = vector.load %arg2[%c2, %c0_12] : memref<8x64xf32, #tpu.memory_space<vmem>>, vector<1x64xf32>
    %18 = vector.broadcast %17 : vector<1x64xf32> to vector<8x64xf32>
    %19 = arith.addf %16, %18 : vector<8x64xf32>
    %cst_13 = arith.constant 0.000000e+00 : f32
    %20 = vector.broadcast %cst_13 : f32 to vector<8x64xf32>
    %21 = arith.maximumf %19, %20 : vector<8x64xf32>
    %c144 = arith.constant 144 : index
    %c0_14 = arith.constant 0 : index
    %22 = vector.load %arg1[%c144, %c0_14] : memref<208x64xf32, #tpu.memory_space<vmem>>, vector<64x8xf32>
    %cst_15 = arith.constant dense<0.000000e+00> : vector<8x8xf32>
    %23 = tpu.matmul %21, %22, %cst_15 {dimension_numbers = #tpu.dot_dimension_numbers<[1], [0], [0], [1], [0, 0, 1, 1], [], []>} : vector<8x64xf32>, vector<64x8xf32>, vector<8x8xf32> -> vector<8x8xf32>
    %c3 = arith.constant 3 : index
    %c0_16 = arith.constant 0 : index
    %24 = vector.load %arg2[%c3, %c0_16] : memref<8x64xf32, #tpu.memory_space<vmem>>, vector<1x8xf32>
    %25 = vector.broadcast %24 : vector<1x8xf32> to vector<8x8xf32>
    %26 = arith.addf %23, %25 : vector<8x8xf32>
    %27 = vector.extract_strided_slice %26 {offsets = [0, 0], sizes = [8, 4], strides = [1, 1]} : vector<8x8xf32> to vector<8x4xf32>
    %c0_17 = arith.constant 0 : index
    %c0_18 = arith.constant 0 : index
    %28 = vector.load %arg3[%c0_17, %c0_18] : memref<8x4xf32, #tpu.memory_space<vmem>>, vector<8x4xf32>
    tpu.vector_store %arg3[%c0_17, %c0_18], %27 {strides = array<i32>} : memref<8x4xf32, #tpu.memory_space<vmem>>, vector<8x4xf32>,
    %29 = vector.extract_strided_slice %26 {offsets = [0, 4], sizes = [8, 4], strides = [1, 1]} : vector<8x8xf32> to vector<8x4xf32>
    %c0_19 = arith.constant 0 : index
    %c0_20 = arith.constant 0 : index
    %30 = vector.load %arg4[%c0_19, %c0_20] : memref<8x4xf32, #tpu.memory_space<vmem>>, vector<8x4xf32>
    tpu.vector_store %arg4[%c0_19, %c0_20], %29 {strides = array<i32>} : memref<8x4xf32, #tpu.memory_space<vmem>>, vector<8x4xf32>,
    return
  }
}

</mosaic_0001>

<llo_original>
// kernel: _forward_impl.1
$region0: #{_forward_impl.1}
  #allocation0 [shape = 'u32[]', space=smem, size = 0x4, offset = 0x4, fixed_abs, tag = 'smem constant byte address 0x4 - core index']
  #allocation1 [shape = 'u32[144,128]{1,0:T(1,128)}', space=vmem, size = 0x12000, scoped, tag = 'internal scratch']
  %s0 = inlined_call_operand.vmem [shape: f32[8,16], index: 0, kind: input, shape index: {}]
  %s1 = inlined_call_operand.vmem [shape: f32[208,64], index: 1, kind: input, shape index: {}]
  %s2 = inlined_call_operand.vmem [shape: f32[8,64], index: 2, kind: input, shape index: {}]
  %s3 = inlined_call_operand.vmem [shape: f32[8,4], index: 3, kind: output, shape index: {0}]
  %s4 = inlined_call_operand.vmem [shape: f32[8,4], index: 4, kind: output, shape index: {1}]
  %5 = xla_tuple %s3, %s4
  %s6 = sld [smem:[#allocation0]]
  $region30: #{_forward_impl.1} parent=0
    _
  %s8 = ssub.s32 1, %s6
  %s9 = scalar_select 0, %s8, %s6
  // Predicated region
  $region2: #{_forward_impl.1} parent=0 // pred_check
    _
  $region3: #{_forward_impl.1} parent=0 // pred_check_branch
    %11 = sbr.rel (0) target = $region5
  $region4: #{_forward_impl.1} parent=0 // pred_region
    _
  $region5: #{_forward_impl.1} parent=0 // pred_fallthru
    _
  // Predicated region
  $region6: #{_forward_impl.1} parent=0 // pred_check
    _
  $region7: #{_forward_impl.1} parent=0 // pred_check_branch
    %13 = sbr.rel (0) target = $region9
  $region8: #{_forward_impl.1} parent=0 // pred_region
    _
  $region9: #{_forward_impl.1} parent=0 // pred_fallthru
    _
  // Predicated region
  $region10: #{_forward_impl.1} parent=0 // pred_check
    _
  $region11: #{_forward_impl.1} parent=0 // pred_check_branch
    %15 = sbr.rel (0) target = $region13
  $region12: #{_forward_impl.1} parent=0 // pred_region
    _
  $region13: #{_forward_impl.1} parent=0 // pred_fallthru
    _
  %v16 = vld [vmem:[%s0] sm:$0xff]
  %v17 = vld [vmem:[%s1] sm:$0xff]
  %v18 = vld [vmem:[%s1 + $0x8] sm:$0xff]
  %v19 = vld [vmem:[%s2] sm:$0x1]
  %v20 = vlaneseq
  %v21 = vshrl.u32 %v20, 7
  %v22 = vsub.s32 0, %v21
  %v23 = vrot.slane %v19, %v22
  %vm24 = vcmask 130048
  %v26 = vsel %vm24, %v16, 0
  %28 = vmatprep.subr.mxu0 0.0
  %29 = vmatpush1.msra.mxu0 %v17
  %30 = vmatprep.subr.mxu0 0.0
  %31 = vmatpush1.msra.mxu0 %v18
  %32 = vmatprep.subr.mxu0 0.0
  %33 = vmatpush1.msra.mxu0 0.0
  %34 = vmatprep.subr.mxu0 0.0
  %35 = vmatpush1.msra.mxu0 0.0
  %36 = vmatprep.subr.mxu0 0.0
  %37 = vmatpush1.msra.mxu0 0.0
  %38 = vmatprep.subr.mxu0 0.0
  %39 = vmatpush1.msra.mxu0 0.0
  %40 = vmatprep.subr.mxu0 0.0
  %41 = vmatpush1.msra.mxu0 0.0
  %42 = vmatprep.subr.mxu0 0.0
  %43 = vmatpush1.msra.mxu0 0.0
  %44 = vmatprep.subr.mxu0 0.0
  %45 = vmatpush1.msra.mxu0 0.0
  %46 = vmatprep.subr.mxu0 0.0
  %47 = vmatpush1.msra.mxu0 0.0
  %48 = vmatprep.subr.mxu0 0.0
  %49 = vmatpush1.msra.mxu0 0.0
  %50 = vmatprep.subr.mxu0 0.0
  %51 = vmatpush1.msra.mxu0 0.0
  %52 = vmatprep.subr.mxu0 0.0
  %53 = vmatpush1.msra.mxu0 0.0
  %54 = vmatprep.subr.mxu0 0.0
  %55 = vmatpush1.msra.mxu0 0.0
  %56 = vmatprep.subr.mxu0 0.0
  %57 = vmatpush1.msra.mxu0 0.0
  %58 = vmatprep.subr.mxu0 0.0
  %59 = vmatpush1.msra.mxu0 0.0
  %60 = vmatprep.subr.mxu0 0.0
  %61 = vmatpush1.msra.mxu0 0.0
  %62 = vmatprep.subr.mxu0 0.0
  %63 = vmatpush1.msra.mxu0 0.0
  %64 = vmatprep.subr.mxu0 0.0
  %65 = vmatpush1.msra.mxu0 0.0
  %66 = vmatprep.subr.mxu0 0.0
  %67 = vmatpush1.msra.mxu0 0.0
  %68 = vmatprep.subr.mxu0 0.0
  %69 = vmatpush1.msra.mxu0 0.0
  %70 = vmatprep.subr.mxu0 0.0
  %71 = vmatpush1.msra.mxu0 0.0
  %72 = vmatprep.subr.mxu0 0.0
  %73 = vmatpush1.msra.mxu0 0.0
  %74 = vmatprep.subr.mxu0 0.0
  %75 = vmatpush1.msra.mxu0 0.0
  %76 = vmatprep.subr.mxu0 0.0
  %77 = vmatpush1.msra.mxu0 0.0
  %78 = vmatprep.subr.mxu0 0.0
  %79 = vmatpush1.msra.mxu0 0.0
  %80 = vmatprep.subr.mxu0 0.0
  %81 = vmatpush1.msra.mxu0 0.0
  %82 = vmatprep.subr.mxu0 0.0
  %83 = vmatpush1.msra.mxu0 0.0
  %84 = vmatprep.subr.mxu0 0.0
  %85 = vmatpush1.msra.mxu0 0.0
  %86 = vmatprep.subr.mxu0 0.0
  %87 = vmatpush1.msra.mxu0 0.0
  %88 = vmatprep.subr.mxu0 0.0
  %89 = vmatpush1.msra.mxu0 0.0
  %90 = vmatprep.subr.mxu0 0.0
  %91 = vmatpush1.msra.mxu0 0.0
  %92 = vmatprep.mubr.f32.mxu0 0.0
  %93 = vmatmul.mubr.f32.gmra.mrb[0].mxu0 %v26
  %v94 = vpop.f32.mrb[0].mxu0
  %v95 = vadd.f32 %v23, %v94
  %v96 = vpop.f32.mrb[0].mxu0
  %97 = vdwg.mxu0
  %v98 = vmax.f32 %v95, 0.0
  %v99 = vld [vmem:[%s1 + $0x10] sm:$0xff]
  %v100 = vld [vmem:[%s1 + $0x18] sm:$0xff]
  %v101 = vld [vmem:[%s1 + $0x20] sm:$0xff]
  %v102 = vld [vmem:[%s1 + $0x28] sm:$0xff]
  %v103 = vld [vmem:[%s1 + $0x30] sm:$0xff]
  %v104 = vld [vmem:[%s1 + $0x38] sm:$0xff]
  %v105 = vld [vmem:[%s1 + $0x40] sm:$0xff]
  %v106 = vld [vmem:[%s1 + $0x48] sm:$0xff]
  %v107 = vld [vmem:[%s2 + $0x1] sm:$0x1]
  %v108 = vlaneseq
  %v109 = vshrl.u32 %v108, 7
  %v110 = vsub.s32 0, %v109
  %v111 = vrot.slane %v107, %v110
  %vm112 = vcmask 523264
  %v114 = vsel %vm112, %v98, 0
  %116 = vmatprep.subr.mxu0 0.0
  %117 = vmatpush1.msra.mxu0 %v99
  %118 = vmatprep.subr.mxu0 0.0
  %119 = vmatpush1.msra.mxu0 %v100
  %120 = vmatprep.subr.mxu0 0.0
  %121 = vmatpush1.msra.mxu0 %v101
  %122 = vmatprep.subr.mxu0 0.0
  %123 = vmatpush1.msra.mxu0 %v102
  %124 = vmatprep.subr.mxu0 0.0
  %125 = vmatpush1.msra.mxu0 %v103
  %126 = vmatprep.subr.mxu0 0.0
  %127 = vmatpush1.msra.mxu0 %v104
  %128 = vmatprep.subr.mxu0 0.0
  %129 = vmatpush1.msra.mxu0 %v105
  %130 = vmatprep.subr.mxu0 0.0
  %131 = vmatpush1.msra.mxu0 %v106
  %132 = vmatprep.subr.mxu0 0.0
  %133 = vmatpush1.msra.mxu0 0.0
  %134 = vmatprep.subr.mxu0 0.0
  %135 = vmatpush1.msra.mxu0 0.0
  %136 = vmatprep.subr.mxu0 0.0
  %137 = vmatpush1.msra.mxu0 0.0
  %138 = vmatprep.subr.mxu0 0.0
  %139 = vmatpush1.msra.mxu0 0.0
  %140 = vmatprep.subr.mxu0 0.0
  %141 = vmatpush1.msra.mxu0 0.0
  %142 = vmatprep.subr.mxu0 0.0
  %143 = vmatpush1.msra.mxu0 0.0
  %144 = vmatprep.subr.mxu0 0.0
  %145 = vmatpush1.msra.mxu0 0.0
  %146 = vmatprep.subr.mxu0 0.0
  %147 = vmatpush1.msra.mxu0 0.0
  %148 = vmatprep.subr.mxu0 0.0
  %149 = vmatpush1.msra.mxu0 0.0
  %150 = vmatprep.subr.mxu0 0.0
  %151 = vmatpush1.msra.mxu0 0.0
  %152 = vmatprep.subr.mxu0 0.0
  %153 = vmatpush1.msra.mxu0 0.0
  %154 = vmatprep.subr.mxu0 0.0
  %155 = vmatpush1.msra.mxu0 0.0
  %156 = vmatprep.subr.mxu0 0.0
  %157 = vmatpush1.msra.mxu0 0.0
  %158 = vmatprep.subr.mxu0 0.0
  %159 = vmatpush1.msra.mxu0 0.0
  %160 = vmatprep.subr.mxu0 0.0
  %161 = vmatpush1.msra.mxu0 0.0
  %162 = vmatprep.subr.mxu0 0.0
  %163 = vmatpush1.msra.mxu0 0.0
  %164 = vmatprep.subr.mxu0 0.0
  %165 = vmatpush1.msra.mxu0 0.0
  %166 = vmatprep.subr.mxu0 0.0
  %167 = vmatpush1.msra.mxu0 0.0
  %168 = vmatprep.subr.mxu0 0.0
  %169 = vmatpush1.msra.mxu0 0.0
  %170 = vmatprep.subr.mxu0 0.0
  %171 = vmatpush1.msra.mxu0 0.0
  %172 = vmatprep.subr.mxu0 0.0
  %173 = vmatpush1.msra.mxu0 0.0
  %174 = vmatprep.subr.mxu0 0.0
  %175 = vmatpush1.msra.mxu0 0.0
  %176 = vmatprep.subr.mxu0 0.0
  %177 = vmatpush1.msra.mxu0 0.0
  %178 = vmatprep.subr.mxu0 0.0
  %179 = vmatpush1.msra.mxu0 0.0
  %180 = vmatprep.mubr.f32.mxu0 0.0
  %181 = vmatmul.mubr.f32.gmra.mrb[0].mxu0 %v114
  %v182 = vpop.f32.mrb[0].mxu0
  %v183 = vadd.f32 %v111, %v182
  %v184 = vpop.f32.mrb[0].mxu0
  %185 = vdwg.mxu0
  %v186 = vmax.f32 %v183, 0.0
  %v187 = vld [vmem:[%s1 + $0x50] sm:$0xff]
  %v188 = vld [vmem:[%s1 + $0x58] sm:$0xff]
  %v189 = vld [vmem:[%s1 + $0x60] sm:$0xff]
  %v190 = vld [vmem:[%s1 + $0x68] sm:$0xff]
  %v191 = vld [vmem:[%s1 + $0x70] sm:$0xff]
  %v192 = vld [vmem:[%s1 + $0x78] sm:$0xff]
  %v193 = vld [vmem:[%s1 + $0x80] sm:$0xff]
  %v194 = vld [vmem:[%s1 + $0x88] sm:$0xff]
  %v195 = vld [vmem:[%s2 + $0x2] sm:$0x1]
  %v196 = vlaneseq
  %v197 = vshrl.u32 %v196, 7
  %v198 = vsub.s32 0, %v197
  %v199 = vrot.slane %v195, %v198
  %v201 = vsel %vm112, %v186, 0
  %203 = vmatprep.subr.mxu0 0.0
  %204 = vmatpush1.msra.mxu0 %v187
  %205 = vmatprep.subr.mxu0 0.0
  %206 = vmatpush1.msra.mxu0 %v188
  %207 = vmatprep.subr.mxu0 0.0
  %208 = vmatpush1.msra.mxu0 %v189
  %209 = vmatprep.subr.mxu0 0.0
  %210 = vmatpush1.msra.mxu0 %v190
  %211 = vmatprep.subr.mxu0 0.0
  %212 = vmatpush1.msra.mxu0 %v191
  %213 = vmatprep.subr.mxu0 0.0
  %214 = vmatpush1.msra.mxu0 %v192
  %215 = vmatprep.subr.mxu0 0.0
  %216 = vmatpush1.msra.mxu0 %v193
  %217 = vmatprep.subr.mxu0 0.0
  %218 = vmatpush1.msra.mxu0 %v194
  %219 = vmatprep.subr.mxu0 0.0
  %220 = vmatpush1.msra.mxu0 0.0
  %221 = vmatprep.subr.mxu0 0.0
  %222 = vmatpush1.msra.mxu0 0.0
  %223 = vmatprep.subr.mxu0 0.0
  %224 = vmatpush1.msra.mxu0 0.0
  %225 = vmatprep.subr.mxu0 0.0
  %226 = vmatpush1.msra.mxu0 0.0
  %227 = vmatprep.subr.mxu0 0.0
  %228 = vmatpush1.msra.mxu0 0.0
  %229 = vmatprep.subr.mxu0 0.0
  %230 = vmatpush1.msra.mxu0 0.0
  %231 = vmatprep.subr.mxu0 0.0
  %232 = vmatpush1.msra.mxu0 0.0
  %233 = vmatprep.subr.mxu0 0.0
  %234 = vmatpush1.msra.mxu0 0.0
  %235 = vmatprep.subr.mxu0 0.0
  %236 = vmatpush1.msra.mxu0 0.0
  %237 = vmatprep.subr.mxu0 0.0
  %238 = vmatpush1.msra.mxu0 0.0
  %239 = vmatprep.subr.mxu0 0.0
  %240 = vmatpush1.msra.mxu0 0.0
  %241 = vmatprep.subr.mxu0 0.0
  %242 = vmatpush1.msra.mxu0 0.0
  %243 = vmatprep.subr.mxu0 0.0
  %244 = vmatpush1.msra.mxu0 0.0
  %245 = vmatprep.subr.mxu0 0.0
  %246 = vmatpush1.msra.mxu0 0.0
  %247 = vmatprep.subr.mxu0 0.0
  %248 = vmatpush1.msra.mxu0 0.0
  %249 = vmatprep.subr.mxu0 0.0
  %250 = vmatpush1.msra.mxu0 0.0
  %251 = vmatprep.subr.mxu0 0.0
  %252 = vmatpush1.msra.mxu0 0.0
  %253 = vmatprep.subr.mxu0 0.0
  %254 = vmatpush1.msra.mxu0 0.0
  %255 = vmatprep.subr.mxu0 0.0
  %256 = vmatpush1.msra.mxu0 0.0
  %257 = vmatprep.subr.mxu0 0.0
  %258 = vmatpush1.msra.mxu0 0.0
  %259 = vmatprep.subr.mxu0 0.0
  %260 = vmatpush1.msra.mxu0 0.0
  %261 = vmatprep.subr.mxu0 0.0
  %262 = vmatpush1.msra.mxu0 0.0
  %263 = vmatprep.subr.mxu0 0.0
  %264 = vmatpush1.msra.mxu0 0.0
  %265 = vmatprep.subr.mxu0 0.0
  %266 = vmatpush1.msra.mxu0 0.0
  %267 = vmatprep.mubr.f32.mxu0 0.0
  %268 = vmatmul.mubr.f32.gmra.mrb[0].mxu0 %v201
  %v269 = vpop.f32.mrb[0].mxu0
  %v270 = vadd.f32 %v199, %v269
  %v271 = vpop.f32.mrb[0].mxu0
  %272 = vdwg.mxu0
  %v273 = vmax.f32 %v270, 0.0
  %v274 = vld [vmem:[%s1 + $0x90] sm:$0xff]
  %v275 = vld [vmem:[%s1 + $0x98] sm:$0xff]
  %v276 = vld [vmem:[%s1 + $0xa0] sm:$0xff]
  %v277 = vld [vmem:[%s1 + $0xa8] sm:$0xff]
  %v278 = vld [vmem:[%s1 + $0xb0] sm:$0xff]
  %v279 = vld [vmem:[%s1 + $0xb8] sm:$0xff]
  %v280 = vld [vmem:[%s1 + $0xc0] sm:$0xff]
  %v281 = vld [vmem:[%s1 + $0xc8] sm:$0xff]
  %v282 = vld [vmem:[%s2 + $0x3] sm:$0x1]
  %v283 = vlaneseq
  %v284 = vshrl.u32 %v283, 7
  %v285 = vsub.s32 0, %v284
  %v286 = vrot.slane %v282, %v285
  %v288 = vsel %vm112, %v273, 0
  %290 = vmatprep.subr.mxu0 0.0
  %291 = vmatpush1.msra.mxu0 %v274
  %292 = vmatprep.subr.mxu0 0.0
  %293 = vmatpush1.msra.mxu0 %v275
  %294 = vmatprep.subr.mxu0 0.0
  %295 = vmatpush1.msra.mxu0 %v276
  %296 = vmatprep.subr.mxu0 0.0
  %297 = vmatpush1.msra.mxu0 %v277
  %298 = vmatprep.subr.mxu0 0.0
  %299 = vmatpush1.msra.mxu0 %v278
  %300 = vmatprep.subr.mxu0 0.0
  %301 = vmatpush1.msra.mxu0 %v279
  %302 = vmatprep.subr.mxu0 0.0
  %303 = vmatpush1.msra.mxu0 %v280
  %304 = vmatprep.subr.mxu0 0.0
  %305 = vmatpush1.msra.mxu0 %v281
  %306 = vmatprep.subr.mxu0 0.0
  %307 = vmatpush1.msra.mxu0 0.0
  %308 = vmatprep.subr.mxu0 0.0
  %309 = vmatpush1.msra.mxu0 0.0
  %310 = vmatprep.subr.mxu0 0.0
  %311 = vmatpush1.msra.mxu0 0.0
  %312 = vmatprep.subr.mxu0 0.0
  %313 = vmatpush1.msra.mxu0 0.0
  %314 = vmatprep.subr.mxu0 0.0
  %315 = vmatpush1.msra.mxu0 0.0
  %316 = vmatprep.subr.mxu0 0.0
  %317 = vmatpush1.msra.mxu0 0.0
  %318 = vmatprep.subr.mxu0 0.0
  %319 = vmatpush1.msra.mxu0 0.0
  %320 = vmatprep.subr.mxu0 0.0
  %321 = vmatpush1.msra.mxu0 0.0
  %322 = vmatprep.subr.mxu0 0.0
  %323 = vmatpush1.msra.mxu0 0.0
  %324 = vmatprep.subr.mxu0 0.0
  %325 = vmatpush1.msra.mxu0 0.0
  %326 = vmatprep.subr.mxu0 0.0
  %327 = vmatpush1.msra.mxu0 0.0
  %328 = vmatprep.subr.mxu0 0.0
  %329 = vmatpush1.msra.mxu0 0.0
  %330 = vmatprep.subr.mxu0 0.0
  %331 = vmatpush1.msra.mxu0 0.0
  %332 = vmatprep.subr.mxu0 0.0
  %333 = vmatpush1.msra.mxu0 0.0
  %334 = vmatprep.subr.mxu0 0.0
  %335 = vmatpush1.msra.mxu0 0.0
  %336 = vmatprep.subr.mxu0 0.0
  %337 = vmatpush1.msra.mxu0 0.0
  %338 = vmatprep.subr.mxu0 0.0
  %339 = vmatpush1.msra.mxu0 0.0
  %340 = vmatprep.subr.mxu0 0.0
  %341 = vmatpush1.msra.mxu0 0.0
  %342 = vmatprep.subr.mxu0 0.0
  %343 = vmatpush1.msra.mxu0 0.0
  %344 = vmatprep.subr.mxu0 0.0
  %345 = vmatpush1.msra.mxu0 0.0
  %346 = vmatprep.subr.mxu0 0.0
  %347 = vmatpush1.msra.mxu0 0.0
  %348 = vmatprep.subr.mxu0 0.0
  %349 = vmatpush1.msra.mxu0 0.0
  %350 = vmatprep.subr.mxu0 0.0
  %351 = vmatpush1.msra.mxu0 0.0
  %352 = vmatprep.subr.mxu0 0.0
  %353 = vmatpush1.msra.mxu0 0.0
  %354 = vmatprep.mubr.f32.mxu0 0.0
  %355 = vmatmul.mubr.f32.gmra.mrb[0].mxu0 %v288
  %v356 = vpop.f32.mrb[0].mxu0
  %v357 = vadd.f32 %v286, %v356
  %v358 = vpop.f32.mrb[0].mxu0
  %359 = vdwg.mxu0
  %vm360 = vcmask 31744
  %361 = vst.msk [vmem:[%s3] sm:$0xff] %vm360, %v357
  %363 = vrot.lane.b32.xlu0 %v357, 124
  %v364 = vpop.permute.xlu0 %363
  %366 = vst.msk [vmem:[%s4] sm:$0xff] %vm360, %v364
  // Predicated region
  $region14: #{_forward_impl.1} parent=0 // pred_check
    _
  $region15: #{_forward_impl.1} parent=0 // pred_check_branch
    %368 = sbr.rel (0) target = $region17
  $region16: #{_forward_impl.1} parent=0 // pred_region
    _
  $region17: #{_forward_impl.1} parent=0 // pred_fallthru
    _
  // Predicated region
  $region18: #{_forward_impl.1} parent=0 // pred_check
    _
  $region19: #{_forward_impl.1} parent=0 // pred_check_branch
    %370 = sbr.rel (0) target = $region21
  $region20: #{_forward_impl.1} parent=0 // pred_region
    _
  $region21: #{_forward_impl.1} parent=0 // pred_fallthru
    _
  // Predicated region
  $region22: #{_forward_impl.1} parent=0 // pred_check
    _
  $region23: #{_forward_impl.1} parent=0 // pred_check_branch
    %372 = sbr.rel (0) target = $region25
  $region24: #{_forward_impl.1} parent=0 // pred_region
    _
  $region25: #{_forward_impl.1} parent=0 // pred_fallthru
    _
  // Predicated region
  $region26: #{_forward_impl.1} parent=0 // pred_check
    _
  $region27: #{_forward_impl.1} parent=0 // pred_check_branch
    %374 = sbr.rel (0) target = $region29
  $region28: #{_forward_impl.1} parent=0 // pred_region
    _
  $region29: #{_forward_impl.1} parent=0 // pred_fallthru
    _

</llo_original>
